<compile_context>
chip_gen: v7x
topology: tpu7x:2x2x1
jax: 0.10.0
libtpu: 0.0.40
codegen_flags: <defaults>
</compile_context>

<pallas_src>
import functools
from math import sqrt

import jax
import jax.numpy as jnp
from jax import lax
from jax.experimental import pallas as pl
from jax.experimental.pallas import tpu as pltpu


# ---------------------------------------------------------------------------
# Stage 1: hoisted input projection  Z = x @ W + b   (one big MXU matmul)
# ---------------------------------------------------------------------------
def _proj_kernel(x_ref, w_ref, b_ref, z_ref):
    z_ref[...] = (
        jnp.dot(x_ref[...], w_ref[...], preferred_element_type=jnp.float32)
        + b_ref[...]
    )


# ---------------------------------------------------------------------------
# Stage 2: sequential LSTM recurrence over a chunk of timesteps
# ---------------------------------------------------------------------------
def _recur_kernel(z_ref, u_ref, h0_ref, c0_ref, h_seq_ref, c_last_ref,
                  h_st, c_st, *, chunk_t):
    ci = pl.program_id(0)

    @pl.when(ci == 0)
    def _():
        h_st[...] = h0_ref[...]
        c_st[...] = c0_ref[...]

    u = u_ref[...]                    # (4, O), rows = (uf, ui, uo, uc); hoisted load

    def step(t, carry):
        h, c = carry                                  # (1, O) each, live in vregs
        zt = z_ref[t]                                 # (4, O) gate-major sublane slab
        # Recurrent scalar term per gate: (1,O)*(4,O) -> lane reduce -> (4,1).
        s = jnp.sum(h * u, axis=-1, keepdims=True)
        g = zt + s                                    # single (4, O) broadcast add
        sg = jax.nn.sigmoid(g[0:3, :])                # f, i, o  (sublane slice: free)
        cp = jnp.tanh(g[3:4, :])                      # candidate cell
        c_new = sg[0:1, :] * c + sg[1:2, :] * cp
        h_new = sg[2:3, :] * jnp.tanh(c_new)
        h_seq_ref[pl.ds(t, 1), :] = h_new             # VMEM store; HBM once per chunk
        return (h_new, c_new)

    h, c = lax.fori_loop(0, chunk_t, step, (h_st[...], c_st[...]), unroll=2)

    # Carry state to the next chunk; c_last block is resident, last chunk wins.
    h_st[...] = h
    c_st[...] = c
    c_last_ref[...] = c


def _row_tile(T, max_tile=256):
    """Largest tile <= max_tile that divides T and is a multiple of 8 (else T)."""
    if T <= max_tile:
        return T
    for c in range(max_tile, 7, -1):
        if T % c == 0 and c % 8 == 0:
            return c
    return T  # fallback: single block


def lstm_layer(x, h0, c0, W, U, B):
    """x: (T, I); h0, c0: (O,); W: (I, 4O)=[wf|wi|wo|wc]; U: (4, O); B: (4, O)."""
    T, I = x.shape
    O = h0.shape[0]
    G = 4 * O

    # ---- Stage 1: one (T, I) @ (I, 4O) matmul with the bias folded in ----
    tm = _row_tile(T)
    z_flat = pl.pallas_call(
        _proj_kernel,
        out_shape=jax.ShapeDtypeStruct((T, G), jnp.float32),
        grid_spec=pltpu.PrefetchScalarGridSpec(
            num_scalar_prefetch=0,
            grid=(T // tm,),
            in_specs=[
                pl.BlockSpec((tm, I), lambda i: (i, 0)),     # x row tile
                pl.BlockSpec((I, G), lambda i: (0, 0)),      # W (resident)
                pl.BlockSpec((1, G), lambda i: (0, 0)),      # bias (resident)
            ],
            out_specs=pl.BlockSpec((tm, G), lambda i: (i, 0)),
        ),
        compiler_params=pltpu.CompilerParams(
            dimension_semantics=("parallel",)),
    )(x, W, B.reshape(1, G))

    # Row-major (T, 4O) -> (T, 4, O): identical memory layout, done outside kernels.
    z3 = z_flat.reshape(T, 4, O)

    # ---- Stage 2: sequential recurrence, chunked over time ----
    ct = _row_tile(T)
    kernel = functools.partial(_recur_kernel, chunk_t=ct)
    h_seq, c_last = pl.pallas_call(
        kernel,
        out_shape=(
            jax.ShapeDtypeStruct((T, O), jnp.float32),
            jax.ShapeDtypeStruct((1, O), jnp.float32),
        ),
        grid_spec=pltpu.PrefetchScalarGridSpec(
            num_scalar_prefetch=0,
            grid=(T // ct,),
            in_specs=[
                pl.BlockSpec((ct, 4, O), lambda c: (c, 0, 0)),   # Z chunk
                pl.BlockSpec((4, O), lambda c: (0, 0)),          # U (resident)
                pl.BlockSpec((1, O), lambda c: (0, 0)),          # h0
                pl.BlockSpec((1, O), lambda c: (0, 0)),          # c0
            ],
            out_specs=[
                pl.BlockSpec((ct, O), lambda c: (c, 0)),         # h sequence chunk
                pl.BlockSpec((1, O), lambda c: (0, 0)),          # c_T
            ],
            scratch_shapes=[
                pltpu.VMEM((1, O), jnp.float32),                 # h carry
                pltpu.VMEM((1, O), jnp.float32),                 # c carry
            ],
        ),
        compiler_params=pltpu.CompilerParams(
            dimension_semantics=("arbitrary",)),     # true time recurrence
    )(z3, U, h0.reshape(1, O), c0.reshape(1, O))

    # h_last == last row of h_seq; no separate kernel output needed.
    return h_seq, (h_seq[-1], c_last[0])


def lstm_reference(x, h0, c0, W, U, B):
    """Pure-JAX reference of the PyTorch module (high-precision matmuls)."""
    O = h0.shape[0]
    hp = lax.Precision.HIGHEST
    wf, wi, wo, wc = W[:, 0:O], W[:, O:2 * O], W[:, 2 * O:3 * O], W[:, 3 * O:4 * O]
    uf, ui, uo, uc = U[0], U[1], U[2], U[3]
    bf, bi, bo, bc = B[0], B[1], B[2], B[3]

    def step(carry, xt):
        ht, ct = carry
        ft = jax.nn.sigmoid(jnp.dot(xt, wf, precision=hp) + jnp.dot(ht, uf, precision=hp) + bf)
        it = jax.nn.sigmoid(jnp.dot(xt, wi, precision=hp) + jnp.dot(ht, ui, precision=hp) + bi)
        ot = jax.nn.sigmoid(jnp.dot(xt, wo, precision=hp) + jnp.dot(ht, uo, precision=hp) + bo)
        cp = jnp.tanh(jnp.dot(xt, wc, precision=hp) + jnp.dot(ht, uc, precision=hp) + bc)
        ct_new = ft * ct + it * cp
        ht_new = ot * jnp.tanh(ct_new)
        return (ht_new, ct_new), ht_new

    (hT, cT), hs = lax.scan(step, (h0, c0), x)
    return hs, (hT, cT)


if __name__ == "__main__":
    T, I, O = 8, 16, 32  # seq, in_features, out_features

    key = jax.random.PRNGKey(0)
    k = jax.random.split(key, 12)
    bound = 1.0 / sqrt(O)

    # Deterministic parameter init mirroring the PyTorch module's uniform init.
    wf = jax.random.uniform(k[0], (I, O), jnp.float32, -bound, bound)
    wi = jax.random.uniform(k[1], (I, O), jnp.float32, -bound, bound)
    wo = jax.random.uniform(k[2], (I, O), jnp.float32, -bound, bound)
    wc = jax.random.uniform(k[3], (I, O), jnp.float32, -bound, bound)
    uf = jax.random.uniform(k[4], (O,), jnp.float32, -bound, bound)
    ui = jax.random.uniform(k[5], (O,), jnp.float32, -bound, bound)
    uo = jax.random.uniform(k[6], (O,), jnp.float32, -bound, bound)
    uc = jax.random.uniform(k[7], (O,), jnp.float32, -bound, bound)
    bf = jnp.zeros((O,), jnp.float32)
    bi = jnp.zeros((O,), jnp.float32)
    bo = jnp.zeros((O,), jnp.float32)
    bc = jnp.zeros((O,), jnp.float32)

    W = jnp.concatenate([wf, wi, wo, wc], axis=1)   # (I, 4O)
    U = jnp.stack([uf, ui, uo, uc], axis=0)         # (4, O)
    B = jnp.stack([bf, bi, bo, bc], axis=0)         # (4, O)

    x = jax.random.normal(k[8], (T, I), jnp.float32)
    h0 = jax.random.normal(k[9], (O,), jnp.float32)
    c0 = jax.random.normal(k[10], (O,), jnp.float32)

    h_seq, (hT, cT) = lstm_layer(x, h0, c0, W, U, B)
    jax.block_until_ready((h_seq, hT, cT))

    h_ref, (hT_ref, cT_ref) = lstm_reference(x, h0, c0, W, U, B)
    assert jnp.allclose(h_seq, h_ref, rtol=1e-5, atol=1e-5)
    assert jnp.allclose(hT, hT_ref, rtol=1e-5, atol=1e-5)
    assert jnp.allclose(cT, cT_ref, rtol=1e-5, atol=1e-5)

    print("KERNEL_OK")
</pallas_src>

<mosaic_0001>
module attributes {stable_mosaic.version = 11 : i64} {
  func.func @_proj_kernel(%arg0: i32, %arg1: memref<8x16xf32, #tpu.memory_space<vmem>>, %arg2: memref<16x128xf32, #tpu.memory_space<vmem>>, %arg3: memref<1x128xf32, #tpu.memory_space<vmem>>, %arg4: memref<8x128xf32, #tpu.memory_space<vmem>>) attributes {dimension_semantics = [#tpu.dimension_semantics<parallel>], iteration_bounds = array<i64: 1>, scalar_prefetch = 0 : i64, scratch_operands = 0 : i64, tpu.core_type = #tpu.core_type<tc>, window_params = [{transform_indices = @transform_0, window_bounds = array<i64: 8, 16>}, {pipeline_mode = #tpu.pipeline_mode<synchronous>, transform_indices = @transform_1, window_bounds = array<i64: 16, 128>}, {pipeline_mode = #tpu.pipeline_mode<synchronous>, transform_indices = @transform_2, window_bounds = array<i64: 1, 128>}, {transform_indices = @transform_3, window_bounds = array<i64: 8, 128>}]} {
    %c0 = arith.constant 0 : index
    %c0_0 = arith.constant 0 : index
    %0 = vector.load %arg1[%c0, %c0_0] : memref<8x16xf32, #tpu.memory_space<vmem>>, vector<8x16xf32>
    %c0_1 = arith.constant 0 : index
    %c0_2 = arith.constant 0 : index
    %1 = vector.load %arg2[%c0_1, %c0_2] : memref<16x128xf32, #tpu.memory_space<vmem>>, vector<16x128xf32>
    %cst = arith.constant dense<0.000000e+00> : vector<8x128xf32>
    %2 = tpu.matmul %0, %1, %cst {dimension_numbers = #tpu.dot_dimension_numbers<[1], [0], [0], [1], [0, 0, 1, 1], [], []>} : vector<8x16xf32>, vector<16x128xf32>, vector<8x128xf32> -> vector<8x128xf32>
    %c0_3 = arith.constant 0 : index
    %c0_4 = arith.constant 0 : index
    %3 = vector.load %arg3[%c0_3, %c0_4] : memref<1x128xf32, #tpu.memory_space<vmem>>, vector<1x128xf32>
    %4 = vector.broadcast %3 : vector<1x128xf32> to vector<8x128xf32>
    %5 = arith.addf %2, %4 : vector<8x128xf32>
    %c0_5 = arith.constant 0 : index
    %c0_6 = arith.constant 0 : index
    %6 = vector.load %arg4[%c0_5, %c0_6] : memref<8x128xf32, #tpu.memory_space<vmem>>, vector<8x128xf32>
    tpu.vector_store %arg4[%c0_5, %c0_6], %5 {strides = array<i32>} : memref<8x128xf32, #tpu.memory_space<vmem>>, vector<8x128xf32>,
    return
  }
  func.func @transform_0(%arg0: i32) -> (i32, i32) {
    %c0_i32 = arith.constant 0 : i32
    %c0_i32_0 = arith.constant 0 : i32
    return %arg0, %c0_i32 : i32, i32
  }
  func.func @transform_1(%arg0: i32) -> (i32, i32) {
    %c0_i32 = arith.constant 0 : i32
    %c0_i32_0 = arith.constant 0 : i32
    %c0_i32_1 = arith.constant 0 : i32
    return %c0_i32, %c0_i32_0 : i32, i32
  }
  func.func @transform_2(%arg0: i32) -> (i32, i32) {
    %c0_i32 = arith.constant 0 : i32
    %c0_i32_0 = arith.constant 0 : i32
    %c0_i32_1 = arith.constant 0 : i32
    return %c0_i32, %c0_i32_0 : i32, i32
  }
  func.func @transform_3(%arg0: i32) -> (i32, i32) {
    %c0_i32 = arith.constant 0 : i32
    %c0_i32_0 = arith.constant 0 : i32
    return %arg0, %c0_i32 : i32, i32
  }
}

</mosaic_0001>

<llo_original>
// kernel: tpu_custom_call.1
$region0: #{tpu_custom_call.1}
  #allocation0 [shape = 'u32[]', space=smem, size = 0x4, offset = 0x4, fixed_abs, tag = 'smem constant byte address 0x4 - core index']
  #allocation1 [shape = 'u32[144,128]{1,0:T(1,128)}', space=vmem, size = 0x12000, scoped, tag = 'internal scratch']
  %s0 = inlined_call_operand.hbm [shape: f32[8,16], index: 0, kind: input, shape index: {}]
  %s1 = inlined_call_operand.hbm [shape: f32[16,128], index: 1, kind: input, shape index: {}]
  %s2 = inlined_call_operand.vmem [shape: f32[1,128], index: 2, kind: input, shape index: {}]
  %s3 = inlined_call_operand.hbm [shape: f32[8,128], index: 3, kind: output, shape index: {}]
  %s4 = sld [smem:[#allocation0]]
  $region30: #{tpu_custom_call.1} parent=0
    _
  %s6 = ssub.s32 1, %s4
  %s7 = scalar_select 0, %s6, %s4
  $region1: #{tpu_custom_call.1} parent=0
    #allocation2 [shape = 'u8[4096]{0}', space=vmem, size = 0x1000, scoped, tag = 'input window, operand 0, single buffered']
    #allocation3 [shape = 's32[1]{0}', space=sflag, size = 0x4, scoped, tag = 'scoped memory for tpu_custom_call.1']
    #allocation4 [shape = 's32[1]{0}', space=sflag, size = 0x4, scoped, tag = 'scoped memory for tpu_custom_call.1']
    #allocation5 [shape = 'u8[8192]{0}', space=vmem, size = 0x2000, scoped, tag = 'input window, operand 1, single buffered']
    #allocation6 [shape = 's32[1]{0}', space=sflag, size = 0x4, scoped, tag = 'scoped memory for tpu_custom_call.1']
    #allocation7 [shape = 'u8[4096]{0}', space=vmem, size = 0x1000, scoped, tag = 'output window, operand 0, single buffered']
    %8 = vsyncpa [#allocation3], 0
    %9 = vsyncpa [#allocation6], 0
    %10 = vsyncpa [#allocation4], 0
    // Predicated region
    $region2: #{tpu_custom_call.1} parent=1 // pred_check
      _
    $region3: #{tpu_custom_call.1} parent=1 // pred_check_branch
      %12 = sbr.rel (0) target = $region5
    $region4: #{tpu_custom_call.1} parent=1 // pred_region
      %s14 = ssub.s32 128, 128
      %15 = vsyncadd [#allocation3], %s14
      %s17 = sshll.u32 [#allocation2], 4
      %s18 = int_to_ptr.vmem [resolvable:$true] %s17
      %20 = dma.hbm_to_vmem [thread:$0]  %s0, 128, %s18, [#allocation3]
    $region5: #{tpu_custom_call.1} parent=1 // pred_fallthru
      _
    // Predicated region
    $region6: #{tpu_custom_call.1} parent=1 // pred_check
      _
    $region7: #{tpu_custom_call.1} parent=1 // pred_check_branch
      %22 = sbr.rel (0) target = $region9
    $region8: #{tpu_custom_call.1} parent=1 // pred_region
      %s24 = ssub.s32 256, 256
      %25 = vsyncadd [#allocation6], %s24
      %s26 = sshll.u32 [#allocation5], 4
      %s27 = int_to_ptr.vmem [resolvable:$true] %s26
      %32 = dma.hbm_to_vmem [thread:$0]  %s1, 256, %s27, [#allocation6], 128, 128, 8
    $region9: #{tpu_custom_call.1} parent=1 // pred_fallthru
      _
    // Predicated region
    $region10: #{tpu_custom_call.1} parent=1 // pred_check
      _
    $region11: #{tpu_custom_call.1} parent=1 // pred_check_branch
      %34 = sbr.rel (0) target = $region13
    $region12: #{tpu_custom_call.1} parent=1 // pred_region
      _
    $region13: #{tpu_custom_call.1} parent=1 // pred_fallthru
      _
    // Predicated region
    $region14: #{tpu_custom_call.1} parent=1 // pred_check
      _
    $region15: #{tpu_custom_call.1} parent=1 // pred_check_branch
      %36 = sbr.rel (0) target = $region17
    $region16: #{tpu_custom_call.1} parent=1 // pred_region
      %37 = dma.done [#allocation3], 128
    $region17: #{tpu_custom_call.1} parent=1 // pred_fallthru
      _
    // Predicated region
    $region18: #{tpu_custom_call.1} parent=1 // pred_check
      _
    $region19: #{tpu_custom_call.1} parent=1 // pred_check_branch
      %39 = sbr.rel (0) target = $region21
    $region20: #{tpu_custom_call.1} parent=1 // pred_region
      %40 = dma.done [#allocation6], 256
    $region21: #{tpu_custom_call.1} parent=1 // pred_fallthru
      _
    %v41 = vld [vmem:[#allocation2] sm:$0xff]
    %v42 = vld [vmem:[#allocation5] sm:$0xff]
    %v43 = vld [vmem:[#allocation5 + $0x8] sm:$0xff]
    %v44 = vld [vmem:[%s2] sm:$0x1]
    %v46 = vlaneseq
    %v47 = vshrl.u32 %v46, 7
    %v48 = vsub.s32 0, %v47
    %v49 = vrot.slane %v44, %v48
    %vm51 = vcmask 130048
    %v53 = vsel %vm51, %v41, 0
    %55 = vmatprep.subr.mxu0 0.0
    %56 = vmatpush1.msra.mxu0 %v42
    %57 = vmatprep.subr.mxu0 0.0
    %58 = vmatpush1.msra.mxu0 %v43
    %59 = vmatprep.subr.mxu0 0.0
    %60 = vmatpush1.msra.mxu0 0.0
    %61 = vmatprep.subr.mxu0 0.0
    %62 = vmatpush1.msra.mxu0 0.0
    %63 = vmatprep.subr.mxu0 0.0
    %64 = vmatpush1.msra.mxu0 0.0
    %65 = vmatprep.subr.mxu0 0.0
    %66 = vmatpush1.msra.mxu0 0.0
    %67 = vmatprep.subr.mxu0 0.0
    %68 = vmatpush1.msra.mxu0 0.0
    %69 = vmatprep.subr.mxu0 0.0
    %70 = vmatpush1.msra.mxu0 0.0
    %71 = vmatprep.subr.mxu0 0.0
    %72 = vmatpush1.msra.mxu0 0.0
    %73 = vmatprep.subr.mxu0 0.0
    %74 = vmatpush1.msra.mxu0 0.0
    %75 = vmatprep.subr.mxu0 0.0
    %76 = vmatpush1.msra.mxu0 0.0
    %77 = vmatprep.subr.mxu0 0.0
    %78 = vmatpush1.msra.mxu0 0.0
    %79 = vmatprep.subr.mxu0 0.0
    %80 = vmatpush1.msra.mxu0 0.0
    %81 = vmatprep.subr.mxu0 0.0
    %82 = vmatpush1.msra.mxu0 0.0
    %83 = vmatprep.subr.mxu0 0.0
    %84 = vmatpush1.msra.mxu0 0.0
    %85 = vmatprep.subr.mxu0 0.0
    %86 = vmatpush1.msra.mxu0 0.0
    %87 = vmatprep.subr.mxu0 0.0
    %88 = vmatpush1.msra.mxu0 0.0
    %89 = vmatprep.subr.mxu0 0.0
    %90 = vmatpush1.msra.mxu0 0.0
    %91 = vmatprep.subr.mxu0 0.0
    %92 = vmatpush1.msra.mxu0 0.0
    %93 = vmatprep.subr.mxu0 0.0
    %94 = vmatpush1.msra.mxu0 0.0
    %95 = vmatprep.subr.mxu0 0.0
    %96 = vmatpush1.msra.mxu0 0.0
    %97 = vmatprep.subr.mxu0 0.0
    %98 = vmatpush1.msra.mxu0 0.0
    %99 = vmatprep.subr.mxu0 0.0
    %100 = vmatpush1.msra.mxu0 0.0
    %101 = vmatprep.subr.mxu0 0.0
    %102 = vmatpush1.msra.mxu0 0.0
    %103 = vmatprep.subr.mxu0 0.0
    %104 = vmatpush1.msra.mxu0 0.0
    %105 = vmatprep.subr.mxu0 0.0
    %106 = vmatpush1.msra.mxu0 0.0
    %107 = vmatprep.subr.mxu0 0.0
    %108 = vmatpush1.msra.mxu0 0.0
    %109 = vmatprep.subr.mxu0 0.0
    %110 = vmatpush1.msra.mxu0 0.0
    %111 = vmatprep.subr.mxu0 0.0
    %112 = vmatpush1.msra.mxu0 0.0
    %113 = vmatprep.subr.mxu0 0.0
    %114 = vmatpush1.msra.mxu0 0.0
    %115 = vmatprep.subr.mxu0 0.0
    %116 = vmatpush1.msra.mxu0 0.0
    %117 = vmatprep.subr.mxu0 0.0
    %118 = vmatpush1.msra.mxu0 0.0
    %119 = vmatprep.mubr.f32.mxu0 0.0
    %120 = vmatmul.mubr.f32.gmra.mrb[0].mxu0 %v53
    %v121 = vpop.f32.mrb[0].mxu0
    %v122 = vadd.f32 %v49, %v121
    %v123 = vpop.f32.mrb[0].mxu0
    %124 = vdwg.mxu0
    %125 = vst [vmem:[#allocation7] sm:$0xff] %v122
    // Predicated region
    $region22: #{tpu_custom_call.1} parent=1 // pred_check
      _
    $region23: #{tpu_custom_call.1} parent=1 // pred_check_branch
      %127 = sbr.rel (0) target = $region25
    $region24: #{tpu_custom_call.1} parent=1 // pred_region
      %s129 = ssub.s32 128, 128
      %130 = vsyncadd [#allocation4], %s129
      %s132 = sshll.u32 [#allocation7], 4
      %s133 = int_to_ptr.vmem [resolvable:$true] %s132
      %135 = dma.vmem_to_hbm [thread:$0]  %s133, 128, %s3, [#allocation4]
    $region25: #{tpu_custom_call.1} parent=1 // pred_fallthru
      _
    // Predicated region
    $region26: #{tpu_custom_call.1} parent=1 // pred_check
      _
    $region27: #{tpu_custom_call.1} parent=1 // pred_check_branch
      %137 = sbr.rel (0) target = $region29
    $region28: #{tpu_custom_call.1} parent=1 // pred_region
      %138 = dma.done [#allocation4], 128
    $region29: #{tpu_custom_call.1} parent=1 // pred_fallthru
      _
    %139 = vsyncpa [#allocation3], 1
    %140 = vsyncpa [#allocation6], 1
    %141 = vsyncpa [#allocation4], 1

</llo_original>
